<compile_context>
chip_gen: v5e
topology: v5e:2x2
jax: 0.10.0
libtpu: 0.0.40
codegen_flags: <defaults>
</compile_context>

<pallas_src>
import jax
import jax.numpy as jnp
from jax.experimental import pallas as pl
from jax.experimental.pallas import tpu as pltpu


def _normalize_kernel(invw_ref, b_ref, x_ref, o_ref):
    # invw_ref, b_ref: (R_blk, 1) per-row reciprocal-scale / shift (row = flat (n, c))
    # x_ref, o_ref:    (R_blk, HW) lane-dense tiles
    o_ref[...] = (x_ref[...] - b_ref[...]) * invw_ref[...]


def _pick_row_block(n_rows, row_bytes, target_bytes=4 * 1024 * 1024):
    """Rows per block: ~target_bytes per tile, multiple of 8 (sublane rule),
    or the full row count if the whole tensor is small."""
    want = max(1, target_bytes // max(row_bytes, 1))
    if want >= n_rows:
        return int(n_rows)
    return int(min(max(8, (want // 8) * 8), n_rows))


def normalize(x, weight, bias):
    """Pallas equivalent of Normalize.forward for NCHW input:
       out = (x - bias[c]) / weight[c]."""
    N, C, H, W = x.shape
    HW = H * W
    n_rows = N * C

    # Lane-dense layout: flatten spatial dims into the last axis.
    x2 = x.reshape(n_rows, HW)

    # Per-row (n, c) shift and reciprocal scale, computed once in the wrapper.
    inv_w = (1.0 / weight).astype(x.dtype)
    invw_rows = jnp.broadcast_to(inv_w[None, :], (N, C)).reshape(n_rows, 1)
    bias_rows = jnp.broadcast_to(bias.astype(x.dtype)[None, :], (N, C)).reshape(n_rows, 1)

    row_bytes = HW * x.dtype.itemsize
    r_blk = _pick_row_block(n_rows, row_bytes)
    grid = (pl.cdiv(n_rows, r_blk),)

    out2 = pl.pallas_call(
        _normalize_kernel,
        out_shape=jax.ShapeDtypeStruct((n_rows, HW), x.dtype),
        grid=grid,
        in_specs=[
            pl.BlockSpec((r_blk, 1), lambda i: (i, 0)),   # 1/weight per row
            pl.BlockSpec((r_blk, 1), lambda i: (i, 0)),   # bias per row
            pl.BlockSpec((r_blk, HW), lambda i: (i, 0)),  # x tile
        ],
        out_specs=pl.BlockSpec((r_blk, HW), lambda i: (i, 0)),
        compiler_params=pltpu.CompilerParams(
            dimension_semantics=("parallel",),
            vmem_limit_bytes=32 * 1024 * 1024,
        ),
        # TODO(synk): add input_output_aliases={2: 0} when callers can donate x
        # (halves peak HBM footprint; needs buffer donation upstream).
    )(invw_rows, bias_rows, x2)

    return out2.reshape(N, C, H, W)


if __name__ == "__main__":
    key = jax.random.PRNGKey(0)
    N, C, H, W = 2, 4, 16, 16
    kx, kw, kb = jax.random.split(key, 3)

    x = jax.random.normal(kx, (N, C, H, W), dtype=jnp.float32)

    # 1) Parameters exactly as in Normalize.__init__(n_channels=C): ones / zeros.
    weight0 = jnp.ones((C,), dtype=jnp.float32)
    bias0 = jnp.zeros((C,), dtype=jnp.float32)
    out0 = jax.block_until_ready(normalize(x, weight0, bias0))
    ref0 = (x - bias0.reshape(1, -1, 1, 1)) / weight0.reshape(1, -1, 1, 1)
    assert out0.shape == x.shape and out0.dtype == x.dtype
    assert jnp.allclose(out0, ref0, atol=1e-6, rtol=1e-6)

    # 2) Non-trivial "learned" parameters to exercise the affine math.
    weight = 0.5 + jax.random.uniform(kw, (C,), dtype=jnp.float32)  # strictly > 0
    bias = jax.random.normal(kb, (C,), dtype=jnp.float32)
    out = jax.block_until_ready(normalize(x, weight, bias))
    ref = (x - bias.reshape(1, -1, 1, 1)) / weight.reshape(1, -1, 1, 1)
    assert out.shape == x.shape and out.dtype == x.dtype
    # multiply-by-reciprocal vs true division -> allow a couple of ulps
    assert jnp.allclose(out, ref, atol=1e-5, rtol=1e-5)

    print("KERNEL_OK")
</pallas_src>

<mosaic_0001>
module attributes {stable_mosaic.version = 11 : i64} {
  func.func @_normalize_kernel(%arg0: i32, %arg1: memref<8x1xf32, #tpu.memory_space<vmem>>, %arg2: memref<8x1xf32, #tpu.memory_space<vmem>>, %arg3: memref<8x256xf32, #tpu.memory_space<vmem>>, %arg4: memref<8x256xf32, #tpu.memory_space<vmem>>) attributes {dimension_semantics = [#tpu.dimension_semantics<parallel>], iteration_bounds = array<i64: 1>, scalar_prefetch = 0 : i64, scratch_operands = 0 : i64, tpu.core_type = #tpu.core_type<tc>, window_params = [{transform_indices = @transform_0, window_bounds = array<i64: 8, 1>}, {transform_indices = @transform_1, window_bounds = array<i64: 8, 1>}, {transform_indices = @transform_2, window_bounds = array<i64: 8, 256>}, {transform_indices = @transform_3, window_bounds = array<i64: 8, 256>}]} {
    %c0 = arith.constant 0 : index
    %c0_0 = arith.constant 0 : index
    %0 = vector.load %arg3[%c0, %c0_0] : memref<8x256xf32, #tpu.memory_space<vmem>>, vector<8x256xf32>
    %c0_1 = arith.constant 0 : index
    %c0_2 = arith.constant 0 : index
    %1 = vector.load %arg2[%c0_1, %c0_2] : memref<8x1xf32, #tpu.memory_space<vmem>>, vector<8x1xf32>
    %2 = vector.broadcast %1 : vector<8x1xf32> to vector<8x256xf32>
    %3 = arith.subf %0, %2 : vector<8x256xf32>
    %c0_3 = arith.constant 0 : index
    %c0_4 = arith.constant 0 : index
    %4 = vector.load %arg1[%c0_3, %c0_4] : memref<8x1xf32, #tpu.memory_space<vmem>>, vector<8x1xf32>
    %5 = vector.broadcast %4 : vector<8x1xf32> to vector<8x256xf32>
    %6 = arith.mulf %3, %5 : vector<8x256xf32>
    %c0_5 = arith.constant 0 : index
    %c0_6 = arith.constant 0 : index
    %7 = vector.load %arg4[%c0_5, %c0_6] : memref<8x256xf32, #tpu.memory_space<vmem>>, vector<8x256xf32>
    tpu.vector_store %arg4[%c0_5, %c0_6], %6 {strides = array<i32>} : memref<8x256xf32, #tpu.memory_space<vmem>>, vector<8x256xf32>,
    return
  }
  func.func @transform_0(%arg0: i32) -> (i32, i32) {
    %c0_i32 = arith.constant 0 : i32
    %c0_i32_0 = arith.constant 0 : i32
    return %arg0, %c0_i32 : i32, i32
  }
  func.func @transform_1(%arg0: i32) -> (i32, i32) {
    %c0_i32 = arith.constant 0 : i32
    %c0_i32_0 = arith.constant 0 : i32
    return %arg0, %c0_i32 : i32, i32
  }
  func.func @transform_2(%arg0: i32) -> (i32, i32) {
    %c0_i32 = arith.constant 0 : i32
    %c0_i32_0 = arith.constant 0 : i32
    return %arg0, %c0_i32 : i32, i32
  }
  func.func @transform_3(%arg0: i32) -> (i32, i32) {
    %c0_i32 = arith.constant 0 : i32
    %c0_i32_0 = arith.constant 0 : i32
    return %arg0, %c0_i32 : i32, i32
  }
}

</mosaic_0001>

<llo_original>
// kernel: tpu_custom_call.1
$region0: #{tpu_custom_call.1}
  #allocation0 [shape = 'u32[]', space=smem, size = 0x4, offset = 0x4, fixed_abs, tag = 'smem constant byte address 0x4 - core index']
  #allocation1 [shape = 'u32[72,128]{1,0:T(1,128)}', space=vmem, size = 0x9000, scoped, tag = 'internal scratch']
  %s0 = inlined_call_operand.vmem [shape: f32[8,1], index: 0, kind: input, shape index: {}]
  %s1 = inlined_call_operand.vmem [shape: f32[8,1], index: 1, kind: input, shape index: {}]
  %s2 = inlined_call_operand.vmem [shape: f32[8,256], index: 2, kind: input, shape index: {}]
  %s3 = inlined_call_operand.hbm [shape: f32[8,256], index: 3, kind: output, shape index: {}]
  %s4 = sld [smem:[#allocation0]]
  $region22: #{tpu_custom_call.1} parent=0
    _
  %s6 = ssub.s32 1, %s4
  %s7 = scalar_select 0, %s6, %s4
  $region1: #{tpu_custom_call.1} parent=0
    #allocation2 [shape = 'u8[8192]{0}', space=vmem, size = 0x2000, scoped, tag = 'output window, operand 0, single buffered']
    #allocation3 [shape = 's32[1]{0}', space=sflag, size = 0x4, scoped, tag = 'scoped memory for tpu_custom_call.1']
    %8 = vsyncpa [#allocation3], 0
    // Predicated region
    $region2: #{tpu_custom_call.1} parent=1 // pred_check
      _
    $region3: #{tpu_custom_call.1} parent=1 // pred_check_branch
      %10 = sbr.rel (0) target = $region5
    $region4: #{tpu_custom_call.1} parent=1 // pred_region
      _
    $region5: #{tpu_custom_call.1} parent=1 // pred_fallthru
      _
    // Predicated region
    $region6: #{tpu_custom_call.1} parent=1 // pred_check
      _
    $region7: #{tpu_custom_call.1} parent=1 // pred_check_branch
      %12 = sbr.rel (0) target = $region9
    $region8: #{tpu_custom_call.1} parent=1 // pred_region
      _
    $region9: #{tpu_custom_call.1} parent=1 // pred_fallthru
      _
    // Predicated region
    $region10: #{tpu_custom_call.1} parent=1 // pred_check
      _
    $region11: #{tpu_custom_call.1} parent=1 // pred_check_branch
      %14 = sbr.rel (0) target = $region13
    $region12: #{tpu_custom_call.1} parent=1 // pred_region
      _
    $region13: #{tpu_custom_call.1} parent=1 // pred_fallthru
      _
    %v15 = vld [vmem:[%s2] sm:$0xff]
    %v16 = vld [vmem:[%s2 + $0x8] sm:$0xff]
    %v17 = vld [vmem:[%s1] sm:$0xff]
    %19 = vset.pattern.permute.xlu0 0
    %20 = vperm.xlu0 %19, %v17
    %v21 = vpop.permute.xlu0 %20
    %v23 = vsub.f32 %v15, %v21
    %v24 = vsub.f32 %v16, %v21
    %v25 = vld [vmem:[%s0] sm:$0xff]
    %27 = vset.pattern.permute.xlu0 0
    %28 = vperm.xlu0 %27, %v25
    %v29 = vpop.permute.xlu0 %28
    %v31 = vmul.f32 %v23, %v29
    %v32 = vmul.f32 %v24, %v29
    %33 = vst [vmem:[#allocation2] sm:$0xff] %v31
    %34 = vst [vmem:[#allocation2 + $0x8] sm:$0xff] %v32
    // Predicated region
    $region14: #{tpu_custom_call.1} parent=1 // pred_check
      _
    $region15: #{tpu_custom_call.1} parent=1 // pred_check_branch
      %36 = sbr.rel (0) target = $region17
    $region16: #{tpu_custom_call.1} parent=1 // pred_region
      %38 = vsyncadd [#allocation3], 0
      %s40 = sshll.u32 [#allocation2], 4
      %s41 = int_to_ptr.vmem [resolvable:$true] %s40
      %s42 = sshll.u32 %s3, 4
      %s43 = int_to_ptr.hbm [resolvable:$true] %s42
      %45 = dma.vmem_to_hbm [thread:$0]  %s41, 256, %s43, [#allocation3]
    $region17: #{tpu_custom_call.1} parent=1 // pred_fallthru
      _
    // Predicated region
    $region18: #{tpu_custom_call.1} parent=1 // pred_check
      _
    $region19: #{tpu_custom_call.1} parent=1 // pred_check_branch
      %47 = sbr.rel (0) target = $region21
    $region20: #{tpu_custom_call.1} parent=1 // pred_region
      %49 = dma.done [#allocation3], 256
    $region21: #{tpu_custom_call.1} parent=1 // pred_fallthru
      _
    %50 = vsyncpa [#allocation3], 1

</llo_original>
